<compile_context>
chip_gen: v5e
topology: v5e:2x2
jax: 0.10.0
libtpu: 0.0.40
codegen_flags: <defaults>
</compile_context>

<pallas_src>
import functools

import jax
import jax.numpy as jnp
from jax.experimental import pallas as pl
from jax.experimental.pallas import tpu as pltpu


def _lm_lstm_kernel(x_ref, wih_ref, whh_ref, b_ref, wout_ref, bout_ref, out_ref,
                    *, seq_len, hidden_dim):
    """Entire LM_LSTM forward in a single invocation.

    x_ref    : (T, E)    bf16 embeddings
    wih_ref  : (E, 4H)   bf16 fused W_ih^T  (lane chunks in PyTorch gate order i|f|g|o)
    whh_ref  : (H, 4H)   bf16 fused W_hh^T
    b_ref    : (1, 4H)   f32  fused (b_ih + b_hh)
    wout_ref : (H, V)    bf16 W_out^T
    bout_ref : (1, V)    f32  b_out
    out_ref  : (T, V)    f32  log-softmax scores
    """
    T, H = seq_len, hidden_dim
    G = 4 * H

    x = x_ref[...]                                                   # (T, E) bf16

    # ---- Batched, non-recurrent input projection: ONE lane-dense MXU matmul for all T rows.
    gx = (jnp.dot(x, wih_ref[...], preferred_element_type=jnp.float32)
          + b_ref[...])                                              # (T, 4H) f32

    # Fused recurrent weights loaded once, reused across the unrolled loop.
    whh = whh_ref[...]                                               # (H, 4H) bf16

    # Static lane mask selecting the tanh ('g') gate chunk [2H, 3H) — hoisted out of the loop.
    lane = jax.lax.broadcasted_iota(jnp.int32, (1, G), dimension=1)
    g_mask = (lane >= 2 * H) & (lane < 3 * H)

    h = jnp.zeros((1, H), jnp.float32)
    c = jnp.zeros((1, H), jnp.float32)
    hs_rows = []

    # ---- Sequential LSTM recurrence, fully unrolled (T small & static).
    # Serial chain per step: 1 fused matmul (MXU) + 2 whole-vreg activations (EUP) + a handful
    # of VALU ops.  For large T, replace with lax.fori_loop(..., unroll=small_k).
    for t in range(T):
        rec = jnp.dot(h.astype(jnp.bfloat16), whh,
                      preferred_element_type=jnp.float32)            # (1, 4H) f32
        pre = gx[t:t + 1, :] + rec                                   # (1, 4H) f32

        # Whole-vreg EUP: one sigmoid + one tanh over the fused pre-activation, single select.
        sig = jax.nn.sigmoid(pre)
        tnh = jnp.tanh(pre)
        act = jnp.where(g_mask, tnh, sig)                            # [ i | f | g | o ]

        i_g = act[:, 0:H]
        f_g = act[:, H:2 * H]
        g_g = act[:, 2 * H:3 * H]
        o_g = act[:, 3 * H:4 * H]

        c = f_g * c + i_g * g_g
        h = o_g * jnp.tanh(c)
        hs_rows.append(h)

    # ---- Batched output projection + log_softmax, once for all T timesteps (no VMEM scratch).
    hs = jnp.concatenate(hs_rows, axis=0)                            # (T, H) f32
    logits = (jnp.dot(hs.astype(jnp.bfloat16), wout_ref[...],
                      preferred_element_type=jnp.float32)
              + bout_ref[...])                                       # (T, V) f32
    m = jnp.max(logits, axis=-1, keepdims=True)
    z = logits - m
    lse = jnp.log(jnp.sum(jnp.exp(z), axis=-1, keepdims=True))
    out_ref[...] = z - lse


def prepare_params(params):
    """One-time weight prep (hoisted out of the per-call path).

    Fuses the 4 gates lane-dense and casts MXU operands to bf16.  PyTorch nn.LSTM stacks gate
    rows in order i, f, g, o along dim 0 of W_ih / W_hh; a plain transpose keeps exactly that
    order along the lane (column) axis — no reordering, so the i|f|g|o lane layout is preserved.
    """
    H = params["w_hh"].shape[1]
    return {
        "embedding": params["embedding"].astype(jnp.bfloat16),            # (Vocab, E)
        "wih_f": params["w_ih"].T.astype(jnp.bfloat16),                    # (E, 4H)
        "whh_f": params["w_hh"].T.astype(jnp.bfloat16),                    # (H, 4H)
        "b_f": (params["b_ih"] + params["b_hh"]).reshape(1, 4 * H).astype(jnp.float32),
        "wout_t": params["w_out"].T.astype(jnp.bfloat16),                  # (H, V)
        "bout": params["b_out"].reshape(1, -1).astype(jnp.float32),        # (1, V)
    }


@jax.jit
def lm_lstm_forward(sentence, prepped):
    """Pallas implementation of LM_LSTM.forward(sentence). `prepped` = prepare_params(params)."""
    # Embedding lookup — data-dependent gather stays in plain JAX glue (fused by jit).
    embeds = jnp.take(prepped["embedding"], sentence, axis=0)             # (T, E) bf16
    T, E = embeds.shape
    H = prepped["whh_f"].shape[0]
    V = prepped["wout_t"].shape[1]

    def full_spec(shape):
        ndim = len(shape)
        return pl.BlockSpec(shape, lambda i, _n=ndim: (0,) * _n)

    kernel = functools.partial(_lm_lstm_kernel, seq_len=T, hidden_dim=H)

    flops = 2 * T * (E * 4 * H + H * 4 * H + H * V)
    transcendentals = T * (9 * H + V)           # 2 whole-vreg activations + tanh(c) + softmax exp
    bytes_accessed = (embeds.size * 2 + prepped["wih_f"].size * 2 + prepped["whh_f"].size * 2
                      + prepped["b_f"].size * 4 + prepped["wout_t"].size * 2
                      + prepped["bout"].size * 4 + T * V * 4)

    out = pl.pallas_call(
        kernel,
        out_shape=jax.ShapeDtypeStruct((T, V), jnp.float32),
        grid_spec=pltpu.PrefetchScalarGridSpec(
            num_scalar_prefetch=0,
            grid=(1,),                       # single invocation; recurrence runs in-kernel
            in_specs=[
                full_spec((T, E)),           # embeds
                full_spec((E, 4 * H)),       # fused W_ih^T  (lane-dense, 4H = 128)
                full_spec((H, 4 * H)),       # fused W_hh^T
                full_spec((1, 4 * H)),       # fused bias
                # NOTE: if tagset/V grows, tile this over V in 128-lane blocks with a streaming
                # logsumexp instead of a resident full block (v7x VMEM is only 64 MiB).
                full_spec((H, V)),           # W_out^T
                full_spec((1, V)),           # b_out
            ],
            out_specs=full_spec((T, V)),
        ),
        compiler_params=pltpu.CompilerParams(
            dimension_semantics=("arbitrary",),
        ),
        cost_estimate=pl.CostEstimate(flops=flops,
                                      transcendentals=transcendentals,
                                      bytes_accessed=bytes_accessed),
    )(embeds, prepped["wih_f"], prepped["whh_f"], prepped["b_f"],
      prepped["wout_t"], prepped["bout"])
    return out


def lm_lstm_reference_f32(sentence, params):
    """Faithful f32 PyTorch-semantics reference."""
    emb = params["embedding"][sentence].astype(jnp.float32)
    H = params["w_hh"].shape[1]

    def step(carry, x):
        h, c = carry
        gates = (params["w_ih"] @ x + params["b_ih"]
                 + params["w_hh"] @ h + params["b_hh"])
        i, f, g, o = jnp.split(gates, 4)
        i = jax.nn.sigmoid(i)
        f = jax.nn.sigmoid(f)
        g = jnp.tanh(g)
        o = jax.nn.sigmoid(o)
        c = f * c + i * g
        h = o * jnp.tanh(c)
        return (h, c), h

    (_, _), hs = jax.lax.scan(
        step, (jnp.zeros((H,), jnp.float32), jnp.zeros((H,), jnp.float32)), emb)
    logits = hs @ params["w_out"].T + params["b_out"]
    return jax.nn.log_softmax(logits, axis=1)


def lm_lstm_reference_quantized(sentence, params):
    """Pure-JAX mirror of the kernel's exact arithmetic (bf16 MXU operands, f32 accumulate)."""
    prepped = prepare_params(params)
    H = params["w_hh"].shape[1]
    x = jnp.take(prepped["embedding"], sentence, axis=0).astype(jnp.float32)   # (T, E)
    T = x.shape[0]
    wih = prepped["wih_f"].astype(jnp.float32)
    whh = prepped["whh_f"].astype(jnp.float32)
    gx = x @ wih + prepped["b_f"]                                              # (T, 4H)
    h = jnp.zeros((1, H), jnp.float32)
    c = jnp.zeros((1, H), jnp.float32)
    hs = []
    for t in range(T):
        pre = gx[t:t + 1] + h.astype(jnp.bfloat16).astype(jnp.float32) @ whh
        i_g = jax.nn.sigmoid(pre[:, 0:H])
        f_g = jax.nn.sigmoid(pre[:, H:2 * H])
        g_g = jnp.tanh(pre[:, 2 * H:3 * H])
        o_g = jax.nn.sigmoid(pre[:, 3 * H:4 * H])
        c = f_g * c + i_g * g_g
        h = o_g * jnp.tanh(c)
        hs.append(h)
    hs = jnp.concatenate(hs, axis=0)                                           # (T, H)
    logits = (hs.astype(jnp.bfloat16).astype(jnp.float32)
              @ prepped["wout_t"].astype(jnp.float32) + prepped["bout"])
    return jax.nn.log_softmax(logits, axis=1)


def init_params(key, vocab_size, embedding_dim, hidden_dim, tagset_size):
    ks = jax.random.split(key, 7)
    scale = 0.1
    return {
        "embedding": scale * jax.random.normal(ks[0], (vocab_size, embedding_dim), jnp.float32),
        "w_ih": scale * jax.random.normal(ks[1], (4 * hidden_dim, embedding_dim), jnp.float32),
        "w_hh": scale * jax.random.normal(ks[2], (4 * hidden_dim, hidden_dim), jnp.float32),
        "b_ih": scale * jax.random.normal(ks[3], (4 * hidden_dim,), jnp.float32),
        "b_hh": scale * jax.random.normal(ks[4], (4 * hidden_dim,), jnp.float32),
        "w_out": scale * jax.random.normal(ks[5], (tagset_size, hidden_dim), jnp.float32),
        "b_out": scale * jax.random.normal(ks[6], (tagset_size,), jnp.float32),
    }


if __name__ == "__main__":
    # Small, module-consistent shapes: seq=8, embedding=32, hidden=32, vocab=64, tagset=16.
    SEQ_LEN, EMB, HID, VOCAB, TAGS = 8, 32, 32, 64, 16

    key = jax.random.PRNGKey(0)
    pkey, skey = jax.random.split(key)
    params = init_params(pkey, VOCAB, EMB, HID, TAGS)
    sentence = jax.random.randint(skey, (SEQ_LEN,), 0, VOCAB, dtype=jnp.int32)

    # Weight prep hoisted out of the per-call path: done once per parameter set.
    prepped = prepare_params(params)

    out = jax.block_until_ready(lm_lstm_forward(sentence, prepped))
    assert out.shape == (SEQ_LEN, TAGS)

    ref_q = jax.block_until_ready(lm_lstm_reference_quantized(sentence, params))
    ref_f = jax.block_until_ready(lm_lstm_reference_f32(sentence, params))
    assert jnp.allclose(out, ref_q, atol=5e-4, rtol=5e-4), "mismatch vs bf16-mirrored reference"
    assert jnp.allclose(out, ref_f, atol=1e-2, rtol=1e-2), "mismatch vs f32 PyTorch-semantics reference"

    print("KERNEL_OK")
</pallas_src>

<mosaic_0001>
module attributes {stable_mosaic.version = 11 : i64} {
  func.func @_lm_lstm_kernel(%arg0: i32, %arg1: memref<8x32xbf16, #tpu.memory_space<vmem>>, %arg2: memref<32x128xbf16, #tpu.memory_space<vmem>>, %arg3: memref<32x128xbf16, #tpu.memory_space<vmem>>, %arg4: memref<1x128xf32, #tpu.memory_space<vmem>>, %arg5: memref<32x16xbf16, #tpu.memory_space<vmem>>, %arg6: memref<1x16xf32, #tpu.memory_space<vmem>>, %arg7: memref<8x16xf32, #tpu.memory_space<vmem>>) attributes {dimension_semantics = [#tpu.dimension_semantics<arbitrary>], iteration_bounds = array<i64: 1>, scalar_prefetch = 0 : i64, scratch_operands = 0 : i64, tpu.core_type = #tpu.core_type<tc>, window_params = [{pipeline_mode = #tpu.pipeline_mode<synchronous>, transform_indices = @transform_0, window_bounds = array<i64: 8, 32>}, {pipeline_mode = #tpu.pipeline_mode<synchronous>, transform_indices = @transform_1, window_bounds = array<i64: 32, 128>}, {pipeline_mode = #tpu.pipeline_mode<synchronous>, transform_indices = @transform_2, window_bounds = array<i64: 32, 128>}, {pipeline_mode = #tpu.pipeline_mode<synchronous>, transform_indices = @transform_3, window_bounds = array<i64: 1, 128>}, {pipeline_mode = #tpu.pipeline_mode<synchronous>, transform_indices = @transform_4, window_bounds = array<i64: 32, 16>}, {pipeline_mode = #tpu.pipeline_mode<synchronous>, transform_indices = @transform_5, window_bounds = array<i64: 1, 16>}, {pipeline_mode = #tpu.pipeline_mode<synchronous>, transform_indices = @transform_6, window_bounds = array<i64: 8, 16>}]} {
    %c0 = arith.constant 0 : index
    %c0_0 = arith.constant 0 : index
    %0 = vector.load %arg1[%c0, %c0_0] : memref<8x32xbf16, #tpu.memory_space<vmem>>, vector<8x32xbf16>
    %c0_1 = arith.constant 0 : index
    %c0_2 = arith.constant 0 : index
    %1 = vector.load %arg2[%c0_1, %c0_2] : memref<32x128xbf16, #tpu.memory_space<vmem>>, vector<32x128xbf16>
    %cst = arith.constant dense<0.000000e+00> : vector<8x128xf32>
    %2 = tpu.matmul %0, %1, %cst {dimension_numbers = #tpu.dot_dimension_numbers<[1], [0], [0], [1], [0, 0, 1, 1], [], []>} : vector<8x32xbf16>, vector<32x128xbf16>, vector<8x128xf32> -> vector<8x128xf32>
    %c0_3 = arith.constant 0 : index
    %c0_4 = arith.constant 0 : index
    %3 = vector.load %arg4[%c0_3, %c0_4] : memref<1x128xf32, #tpu.memory_space<vmem>>, vector<1x128xf32>
    %4 = vector.broadcast %3 : vector<1x128xf32> to vector<8x128xf32>
    %5 = arith.addf %2, %4 : vector<8x128xf32>
    %c0_5 = arith.constant 0 : index
    %c0_6 = arith.constant 0 : index
    %6 = vector.load %arg3[%c0_5, %c0_6] : memref<32x128xbf16, #tpu.memory_space<vmem>>, vector<32x128xbf16>
    %7 = tpu.iota {dimensions = array<i32: 1>} : vector<1x128xi32>
    %c64_i32 = arith.constant 64 : i32
    %8 = vector.broadcast %c64_i32 : i32 to vector<1x128xi32>
    %9 = arith.cmpi sge, %7, %8 : vector<1x128xi32>
    %c96_i32 = arith.constant 96 : i32
    %10 = vector.broadcast %c96_i32 : i32 to vector<1x128xi32>
    %11 = arith.cmpi slt, %7, %10 : vector<1x128xi32>
    %12 = arith.andi %9, %11 : vector<1x128xi1>
    %cst_7 = arith.constant 0.000000e+00 : f32
    %13 = vector.broadcast %cst_7 : f32 to vector<1x32xf32>
    %cst_8 = arith.constant 0.000000e+00 : f32
    %14 = vector.broadcast %cst_8 : f32 to vector<1x32xf32>
    %15 = arith.truncf %13 : vector<1x32xf32> to vector<1x32xbf16>
    %cst_9 = arith.constant dense<0.000000e+00> : vector<1x128xf32>
    %16 = tpu.matmul %15, %6, %cst_9 {dimension_numbers = #tpu.dot_dimension_numbers<[1], [0], [0], [1], [0, 0, 1, 1], [], []>} : vector<1x32xbf16>, vector<32x128xbf16>, vector<1x128xf32> -> vector<1x128xf32>
    %17 = vector.extract_strided_slice %5 {offsets = [0, 0], sizes = [1, 128], strides = [1, 1]} : vector<8x128xf32> to vector<1x128xf32>
    %18 = arith.addf %17, %16 : vector<1x128xf32>
    %19 = arith.negf %18 : vector<1x128xf32>
    %20 = math.exp %19 : vector<1x128xf32>
    %cst_10 = arith.constant 1.000000e+00 : f32
    %21 = vector.broadcast %cst_10 : f32 to vector<1x128xf32>
    %22 = arith.addf %21, %20 : vector<1x128xf32>
    %23 = arith.divf %21, %22 : vector<1x128xf32>
    %24 = math.tanh %18 : vector<1x128xf32>
    %25 = arith.select %12, %24, %23 : vector<1x128xi1>, vector<1x128xf32>
    %26 = vector.extract_strided_slice %25 {offsets = [0, 0], sizes = [1, 32], strides = [1, 1]} : vector<1x128xf32> to vector<1x32xf32>
    %27 = vector.extract_strided_slice %25 {offsets = [0, 32], sizes = [1, 32], strides = [1, 1]} : vector<1x128xf32> to vector<1x32xf32>
    %28 = vector.extract_strided_slice %25 {offsets = [0, 64], sizes = [1, 32], strides = [1, 1]} : vector<1x128xf32> to vector<1x32xf32>
    %29 = vector.extract_strided_slice %25 {offsets = [0, 96], sizes = [1, 32], strides = [1, 1]} : vector<1x128xf32> to vector<1x32xf32>
    %30 = arith.mulf %27, %14 : vector<1x32xf32>
    %31 = arith.mulf %26, %28 : vector<1x32xf32>
    %32 = arith.addf %30, %31 : vector<1x32xf32>
    %33 = math.tanh %32 : vector<1x32xf32>
    %34 = arith.mulf %29, %33 : vector<1x32xf32>
    %35 = arith.truncf %34 : vector<1x32xf32> to vector<1x32xbf16>
    %cst_11 = arith.constant dense<0.000000e+00> : vector<1x128xf32>
    %36 = tpu.matmul %35, %6, %cst_11 {dimension_numbers = #tpu.dot_dimension_numbers<[1], [0], [0], [1], [0, 0, 1, 1], [], []>} : vector<1x32xbf16>, vector<32x128xbf16>, vector<1x128xf32> -> vector<1x128xf32>
    %37 = vector.extract_strided_slice %5 {offsets = [1, 0], sizes = [1, 128], strides = [1, 1]} : vector<8x128xf32> to vector<1x128xf32>
    %38 = arith.addf %37, %36 : vector<1x128xf32>
    %39 = arith.negf %38 : vector<1x128xf32>
    %40 = math.exp %39 : vector<1x128xf32>
    %cst_12 = arith.constant 1.000000e+00 : f32
    %41 = vector.broadcast %cst_12 : f32 to vector<1x128xf32>
    %42 = arith.addf %41, %40 : vector<1x128xf32>
    %43 = arith.divf %41, %42 : vector<1x128xf32>
    %44 = math.tanh %38 : vector<1x128xf32>
    %45 = arith.select %12, %44, %43 : vector<1x128xi1>, vector<1x128xf32>
    %46 = vector.extract_strided_slice %45 {offsets = [0, 0], sizes = [1, 32], strides = [1, 1]} : vector<1x128xf32> to vector<1x32xf32>
    %47 = vector.extract_strided_slice %45 {offsets = [0, 32], sizes = [1, 32], strides = [1, 1]} : vector<1x128xf32> to vector<1x32xf32>
    %48 = vector.extract_strided_slice %45 {offsets = [0, 64], sizes = [1, 32], strides = [1, 1]} : vector<1x128xf32> to vector<1x32xf32>
    %49 = vector.extract_strided_slice %45 {offsets = [0, 96], sizes = [1, 32], strides = [1, 1]} : vector<1x128xf32> to vector<1x32xf32>
    %50 = arith.mulf %47, %32 : vector<1x32xf32>
    %51 = arith.mulf %46, %48 : vector<1x32xf32>
    %52 = arith.addf %50, %51 : vector<1x32xf32>
    %53 = math.tanh %52 : vector<1x32xf32>
    %54 = arith.mulf %49, %53 : vector<1x32xf32>
    %55 = arith.truncf %54 : vector<1x32xf32> to vector<1x32xbf16>
    %cst_13 = arith.constant dense<0.000000e+00> : vector<1x128xf32>
    %56 = tpu.matmul %55, %6, %cst_13 {dimension_numbers = #tpu.dot_dimension_numbers<[1], [0], [0], [1], [0, 0, 1, 1], [], []>} : vector<1x32xbf16>, vector<32x128xbf16>, vector<1x128xf32> -> vector<1x128xf32>
    %57 = vector.extract_strided_slice %5 {offsets = [2, 0], sizes = [1, 128], strides = [1, 1]} : vector<8x128xf32> to vector<1x128xf32>
    %58 = arith.addf %57, %56 : vector<1x128xf32>
    %59 = arith.negf %58 : vector<1x128xf32>
    %60 = math.exp %59 : vector<1x128xf32>
    %cst_14 = arith.constant 1.000000e+00 : f32
    %61 = vector.broadcast %cst_14 : f32 to vector<1x128xf32>
    %62 = arith.addf %61, %60 : vector<1x128xf32>
    %63 = arith.divf %61, %62 : vector<1x128xf32>
    %64 = math.tanh %58 : vector<1x128xf32>
    %65 = arith.select %12, %64, %63 : vector<1x128xi1>, vector<1x128xf32>
    %66 = vector.extract_strided_slice %65 {offsets = [0, 0], sizes = [1, 32], strides = [1, 1]} : vector<1x128xf32> to vector<1x32xf32>
    %67 = vector.extract_strided_slice %65 {offsets = [0, 32], sizes = [1, 32], strides = [1, 1]} : vector<1x128xf32> to vector<1x32xf32>
    %68 = vector.extract_strided_slice %65 {offsets = [0, 64], sizes = [1, 32], strides = [1, 1]} : vector<1x128xf32> to vector<1x32xf32>
    %69 = vector.extract_strided_slice %65 {offsets = [0, 96], sizes = [1, 32], strides = [1, 1]} : vector<1x128xf32> to vector<1x32xf32>
    %70 = arith.mulf %67, %52 : vector<1x32xf32>
    %71 = arith.mulf %66, %68 : vector<1x32xf32>
    %72 = arith.addf %70, %71 : vector<1x32xf32>
    %73 = math.tanh %72 : vector<1x32xf32>
    %74 = arith.mulf %69, %73 : vector<1x32xf32>
    %75 = arith.truncf %74 : vector<1x32xf32> to vector<1x32xbf16>
    %cst_15 = arith.constant dense<0.000000e+00> : vector<1x128xf32>
    %76 = tpu.matmul %75, %6, %cst_15 {dimension_numbers = #tpu.dot_dimension_numbers<[1], [0], [0], [1], [0, 0, 1, 1], [], []>} : vector<1x32xbf16>, vector<32x128xbf16>, vector<1x128xf32> -> vector<1x128xf32>
    %77 = vector.extract_strided_slice %5 {offsets = [3, 0], sizes = [1, 128], strides = [1, 1]} : vector<8x128xf32> to vector<1x128xf32>
    %78 = arith.addf %77, %76 : vector<1x128xf32>
    %79 = arith.negf %78 : vector<1x128xf32>
    %80 = math.exp %79 : vector<1x128xf32>
    %cst_16 = arith.constant 1.000000e+00 : f32
    %81 = vector.broadcast %cst_16 : f32 to vector<1x128xf32>
    %82 = arith.addf %81, %80 : vector<1x128xf32>
    %83 = arith.divf %81, %82 : vector<1x128xf32>
    %84 = math.tanh %78 : vector<1x128xf32>
    %85 = arith.select %12, %84, %83 : vector<1x128xi1>, vector<1x128xf32>
    %86 = vector.extract_strided_slice %85 {offsets = [0, 0], sizes = [1, 32], strides = [1, 1]} : vector<1x128xf32> to vector<1x32xf32>
    %87 = vector.extract_strided_slice %85 {offsets = [0, 32], sizes = [1, 32], strides = [1, 1]} : vector<1x128xf32> to vector<1x32xf32>
    %88 = vector.extract_strided_slice %85 {offsets = [0, 64], sizes = [1, 32], strides = [1, 1]} : vector<1x128xf32> to vector<1x32xf32>
    %89 = vector.extract_strided_slice %85 {offsets = [0, 96], sizes = [1, 32], strides = [1, 1]} : vector<1x128xf32> to vector<1x32xf32>
    %90 = arith.mulf %87, %72 : vector<1x32xf32>
    %91 = arith.mulf %86, %88 : vector<1x32xf32>
    %92 = arith.addf %90, %91 : vector<1x32xf32>
    %93 = math.tanh %92 : vector<1x32xf32>
    %94 = arith.mulf %89, %93 : vector<1x32xf32>
    %95 = arith.truncf %94 : vector<1x32xf32> to vector<1x32xbf16>
    %cst_17 = arith.constant dense<0.000000e+00> : vector<1x128xf32>
    %96 = tpu.matmul %95, %6, %cst_17 {dimension_numbers = #tpu.dot_dimension_numbers<[1], [0], [0], [1], [0, 0, 1, 1], [], []>} : vector<1x32xbf16>, vector<32x128xbf16>, vector<1x128xf32> -> vector<1x128xf32>
    %97 = vector.extract_strided_slice %5 {offsets = [4, 0], sizes = [1, 128], strides = [1, 1]} : vector<8x128xf32> to vector<1x128xf32>
    %98 = arith.addf %97, %96 : vector<1x128xf32>
    %99 = arith.negf %98 : vector<1x128xf32>
    %100 = math.exp %99 : vector<1x128xf32>
    %cst_18 = arith.constant 1.000000e+00 : f32
    %101 = vector.broadcast %cst_18 : f32 to vector<1x128xf32>
    %102 = arith.addf %101, %100 : vector<1x128xf32>
    %103 = arith.divf %101, %102 : vector<1x128xf32>
    %104 = math.tanh %98 : vector<1x128xf32>
    %105 = arith.select %12, %104, %103 : vector<1x128xi1>, vector<1x128xf32>
    %106 = vector.extract_strided_slice %105 {offsets = [0, 0], sizes = [1, 32], strides = [1, 1]} : vector<1x128xf32> to vector<1x32xf32>
    %107 = vector.extract_strided_slice %105 {offsets = [0, 32], sizes = [1, 32], strides = [1, 1]} : vector<1x128xf32> to vector<1x32xf32>
    %108 = vector.extract_strided_slice %105 {offsets = [0, 64], sizes = [1, 32], strides = [1, 1]} : vector<1x128xf32> to vector<1x32xf32>
    %109 = vector.extract_strided_slice %105 {offsets = [0, 96], sizes = [1, 32], strides = [1, 1]} : vector<1x128xf32> to vector<1x32xf32>
    %110 = arith.mulf %107, %92 : vector<1x32xf32>
    %111 = arith.mulf %106, %108 : vector<1x32xf32>
    %112 = arith.addf %110, %111 : vector<1x32xf32>
    %113 = math.tanh %112 : vector<1x32xf32>
    %114 = arith.mulf %109, %113 : vector<1x32xf32>
    %115 = arith.truncf %114 : vector<1x32xf32> to vector<1x32xbf16>
    %cst_19 = arith.constant dense<0.000000e+00> : vector<1x128xf32>
    %116 = tpu.matmul %115, %6, %cst_19 {dimension_numbers = #tpu.dot_dimension_numbers<[1], [0], [0], [1], [0, 0, 1, 1], [], []>} : vector<1x32xbf16>, vector<32x128xbf16>, vector<1x128xf32> -> vector<1x128xf32>
    %117 = vector.extract_strided_slice %5 {offsets = [5, 0], sizes = [1, 128], strides = [1, 1]} : vector<8x128xf32> to vector<1x128xf32>
    %118 = arith.addf %117, %116 : vector<1x128xf32>
    %119 = arith.negf %118 : vector<1x128xf32>
    %120 = math.exp %119 : vector<1x128xf32>
    %cst_20 = arith.constant 1.000000e+00 : f32
    %121 = vector.broadcast %cst_20 : f32 to vector<1x128xf32>
    %122 = arith.addf %121, %120 : vector<1x128xf32>
    %123 = arith.divf %121, %122 : vector<1x128xf32>
    %124 = math.tanh %118 : vector<1x128xf32>
    %125 = arith.select %12, %124, %123 : vector<1x128xi1>, vector<1x128xf32>
    %126 = vector.extract_strided_slice %125 {offsets = [0, 0], sizes = [1, 32], strides = [1, 1]} : vector<1x128xf32> to vector<1x32xf32>
    %127 = vector.extract_strided_slice %125 {offsets = [0, 32], sizes = [1, 32], strides = [1, 1]} : vector<1x128xf32> to vector<1x32xf32>
    %128 = vector.extract_strided_slice %125 {offsets = [0, 64], sizes = [1, 32], strides = [1, 1]} : vector<1x128xf32> to vector<1x32xf32>
    %129 = vector.extract_strided_slice %125 {offsets = [0, 96], sizes = [1, 32], strides = [1, 1]} : vector<1x128xf32> to vector<1x32xf32>
    %130 = arith.mulf %127, %112 : vector<1x32xf32>
    %131 = arith.mulf %126, %128 : vector<1x32xf32>
    %132 = arith.addf %130, %131 : vector<1x32xf32>
    %133 = math.tanh %132 : vector<1x32xf32>
    %134 = arith.mulf %129, %133 : vector<1x32xf32>
    %135 = arith.truncf %134 : vector<1x32xf32> to vector<1x32xbf16>
    %cst_21 = arith.constant dense<0.000000e+00> : vector<1x128xf32>
    %136 = tpu.matmul %135, %6, %cst_21 {dimension_numbers = #tpu.dot_dimension_numbers<[1], [0], [0], [1], [0, 0, 1, 1], [], []>} : vector<1x32xbf16>, vector<32x128xbf16>, vector<1x128xf32> -> vector<1x128xf32>
    %137 = vector.extract_strided_slice %5 {offsets = [6, 0], sizes = [1, 128], strides = [1, 1]} : vector<8x128xf32> to vector<1x128xf32>
    %138 = arith.addf %137, %136 : vector<1x128xf32>
    %139 = arith.negf %138 : vector<1x128xf32>
    %140 = math.exp %139 : vector<1x128xf32>
    %cst_22 = arith.constant 1.000000e+00 : f32
    %141 = vector.broadcast %cst_22 : f32 to vector<1x128xf32>
    %142 = arith.addf %141, %140 : vector<1x128xf32>
    %143 = arith.divf %141, %142 : vector<1x128xf32>
    %144 = math.tanh %138 : vector<1x128xf32>
    %145 = arith.select %12, %144, %143 : vector<1x128xi1>, vector<1x128xf32>
    %146 = vector.extract_strided_slice %145 {offsets = [0, 0], sizes = [1, 32], strides = [1, 1]} : vector<1x128xf32> to vector<1x32xf32>
    %147 = vector.extract_strided_slice %145 {offsets = [0, 32], sizes = [1, 32], strides = [1, 1]} : vector<1x128xf32> to vector<1x32xf32>
    %148 = vector.extract_strided_slice %145 {offsets = [0, 64], sizes = [1, 32], strides = [1, 1]} : vector<1x128xf32> to vector<1x32xf32>
    %149 = vector.extract_strided_slice %145 {offsets = [0, 96], sizes = [1, 32], strides = [1, 1]} : vector<1x128xf32> to vector<1x32xf32>
    %150 = arith.mulf %147, %132 : vector<1x32xf32>
    %151 = arith.mulf %146, %148 : vector<1x32xf32>
    %152 = arith.addf %150, %151 : vector<1x32xf32>
    %153 = math.tanh %152 : vector<1x32xf32>
    %154 = arith.mulf %149, %153 : vector<1x32xf32>
    %155 = arith.truncf %154 : vector<1x32xf32> to vector<1x32xbf16>
    %cst_23 = arith.constant dense<0.000000e+00> : vector<1x128xf32>
    %156 = tpu.matmul %155, %6, %cst_23 {dimension_numbers = #tpu.dot_dimension_numbers<[1], [0], [0], [1], [0, 0, 1, 1], [], []>} : vector<1x32xbf16>, vector<32x128xbf16>, vector<1x128xf32> -> vector<1x128xf32>
    %157 = vector.extract_strided_slice %5 {offsets = [7, 0], sizes = [1, 128], strides = [1, 1]} : vector<8x128xf32> to vector<1x128xf32>
    %158 = arith.addf %157, %156 : vector<1x128xf32>
    %159 = arith.negf %158 : vector<1x128xf32>
    %160 = math.exp %159 : vector<1x128xf32>
    %cst_24 = arith.constant 1.000000e+00 : f32
    %161 = vector.broadcast %cst_24 : f32 to vector<1x128xf32>
    %162 = arith.addf %161, %160 : vector<1x128xf32>
    %163 = arith.divf %161, %162 : vector<1x128xf32>
    %164 = math.tanh %158 : vector<1x128xf32>
    %165 = arith.select %12, %164, %163 : vector<1x128xi1>, vector<1x128xf32>
    %166 = vector.extract_strided_slice %165 {offsets = [0, 0], sizes = [1, 32], strides = [1, 1]} : vector<1x128xf32> to vector<1x32xf32>
    %167 = vector.extract_strided_slice %165 {offsets = [0, 32], sizes = [1, 32], strides = [1, 1]} : vector<1x128xf32> to vector<1x32xf32>
    %168 = vector.extract_strided_slice %165 {offsets = [0, 64], sizes = [1, 32], strides = [1, 1]} : vector<1x128xf32> to vector<1x32xf32>
    %169 = vector.extract_strided_slice %165 {offsets = [0, 96], sizes = [1, 32], strides = [1, 1]} : vector<1x128xf32> to vector<1x32xf32>
    %170 = arith.mulf %167, %152 : vector<1x32xf32>
    %171 = arith.mulf %166, %168 : vector<1x32xf32>
    %172 = arith.addf %170, %171 : vector<1x32xf32>
    %173 = math.tanh %172 : vector<1x32xf32>
    %174 = arith.mulf %169, %173 : vector<1x32xf32>
    %175 = tpu.concatenate %34, %54, %74, %94, %114, %134, %154, %174 in 0 : vector<1x32xf32>, vector<1x32xf32>, vector<1x32xf32>, vector<1x32xf32>, vector<1x32xf32>, vector<1x32xf32>, vector<1x32xf32>, vector<1x32xf32> -> vector<8x32xf32>
    %176 = arith.truncf %175 : vector<8x32xf32> to vector<8x32xbf16>
    %c0_25 = arith.constant 0 : index
    %c0_26 = arith.constant 0 : index
    %177 = vector.load %arg5[%c0_25, %c0_26] : memref<32x16xbf16, #tpu.memory_space<vmem>>, vector<32x16xbf16>
    %cst_27 = arith.constant dense<0.000000e+00> : vector<8x16xf32>
    %178 = tpu.matmul %176, %177, %cst_27 {dimension_numbers = #tpu.dot_dimension_numbers<[1], [0], [0], [1], [0, 0, 1, 1], [], []>} : vector<8x32xbf16>, vector<32x16xbf16>, vector<8x16xf32> -> vector<8x16xf32>
    %c0_28 = arith.constant 0 : index
    %c0_29 = arith.constant 0 : index
    %179 = vector.load %arg6[%c0_28, %c0_29] : memref<1x16xf32, #tpu.memory_space<vmem>>, vector<1x16xf32>
    %180 = vector.broadcast %179 : vector<1x16xf32> to vector<8x16xf32>
    %181 = arith.addf %178, %180 : vector<8x16xf32>
    %cst_30 = arith.constant dense<0xFF800000> : vector<8xf32>
    %182 = vector.multi_reduction <maximumf>, %181, %cst_30 [1] : vector<8x16xf32> to vector<8xf32>
    %183 = vector.shape_cast %182 : vector<8xf32> to vector<8x1xf32>
    %184 = vector.broadcast %183 : vector<8x1xf32> to vector<8x16xf32>
    %185 = arith.subf %181, %184 : vector<8x16xf32>
    %186 = math.exp %185 : vector<8x16xf32>
    %cst_31 = arith.constant dense<0.000000e+00> : vector<8xf32>
    %187 = vector.multi_reduction <add>, %186, %cst_31 [1] : vector<8x16xf32> to vector<8xf32>
    %188 = vector.shape_cast %187 : vector<8xf32> to vector<8x1xf32>
    %189 = math.log %188 : vector<8x1xf32>
    %190 = vector.broadcast %189 : vector<8x1xf32> to vector<8x16xf32>
    %191 = arith.subf %185, %190 : vector<8x16xf32>
    %c0_32 = arith.constant 0 : index
    %c0_33 = arith.constant 0 : index
    %192 = vector.load %arg7[%c0_32, %c0_33] : memref<8x16xf32, #tpu.memory_space<vmem>>, vector<8x16xf32>
    tpu.vector_store %arg7[%c0_32, %c0_33], %191 {strides = array<i32>} : memref<8x16xf32, #tpu.memory_space<vmem>>, vector<8x16xf32>,
    return
  }
  func.func @transform_0(%arg0: i32) -> (i32, i32) {
    %c0_i32 = arith.constant 0 : i32
    %c0_i32_0 = arith.constant 0 : i32
    %c0_i32_1 = arith.constant 0 : i32
    return %c0_i32, %c0_i32_0 : i32, i32
  }
  func.func @transform_1(%arg0: i32) -> (i32, i32) {
    %c0_i32 = arith.constant 0 : i32
    %c0_i32_0 = arith.constant 0 : i32
    %c0_i32_1 = arith.constant 0 : i32
    return %c0_i32, %c0_i32_0 : i32, i32
  }
  func.func @transform_2(%arg0: i32) -> (i32, i32) {
    %c0_i32 = arith.constant 0 : i32
    %c0_i32_0 = arith.constant 0 : i32
    %c0_i32_1 = arith.constant 0 : i32
    return %c0_i32, %c0_i32_0 : i32, i32
  }
  func.func @transform_3(%arg0: i32) -> (i32, i32) {
    %c0_i32 = arith.constant 0 : i32
    %c0_i32_0 = arith.constant 0 : i32
    %c0_i32_1 = arith.constant 0 : i32
    return %c0_i32, %c0_i32_0 : i32, i32
  }
  func.func @transform_4(%arg0: i32) -> (i32, i32) {
    %c0_i32 = arith.constant 0 : i32
    %c0_i32_0 = arith.constant 0 : i32
    %c0_i32_1 = arith.constant 0 : i32
    return %c0_i32, %c0_i32_0 : i32, i32
  }
  func.func @transform_5(%arg0: i32) -> (i32, i32) {
    %c0_i32 = arith.constant 0 : i32
    %c0_i32_0 = arith.constant 0 : i32
    %c0_i32_1 = arith.constant 0 : i32
    return %c0_i32, %c0_i32_0 : i32, i32
  }
  func.func @transform_6(%arg0: i32) -> (i32, i32) {
    %c0_i32 = arith.constant 0 : i32
    %c0_i32_0 = arith.constant 0 : i32
    %c0_i32_1 = arith.constant 0 : i32
    return %c0_i32, %c0_i32_0 : i32, i32
  }
}

</mosaic_0001>

<llo_original>
// kernel: lm_lstm_forward.1
$region0: #{lm_lstm_forward.1}
  #allocation0 [shape = 'u32[]', space=smem, size = 0x4, offset = 0x4, fixed_abs, tag = 'smem constant byte address 0x4 - core index']
  #allocation1 [shape = 'u32[72,128]{1,0:T(1,128)}', space=vmem, size = 0x9000, scoped, tag = 'internal scratch']
  %s0 = inlined_call_operand.vmem [shape: bf16[8,32], index: 0, kind: input, shape index: {}]
  %s1 = inlined_call_operand.vmem [shape: bf16[32,128], index: 1, kind: input, shape index: {}]
  %s2 = inlined_call_operand.vmem [shape: bf16[32,128], index: 2, kind: input, shape index: {}]
  %s3 = inlined_call_operand.vmem [shape: f32[1,128], index: 3, kind: input, shape index: {}]
  %s4 = inlined_call_operand.vmem [shape: bf16[32,16], index: 4, kind: input, shape index: {}]
  %s5 = inlined_call_operand.vmem [shape: f32[1,16], index: 5, kind: input, shape index: {}]
  %s6 = inlined_call_operand.hbm [shape: f32[8,16], index: 6, kind: output, shape index: {}]
  %s7 = sld [smem:[#allocation0]]
  $region34: #{lm_lstm_forward.1} parent=0
    _
  %s9 = ssub.s32 1, %s7
  %s10 = scalar_select 0, %s9, %s7
  $region1: #{lm_lstm_forward.1} parent=0
    #allocation2 [shape = 'u8[4096]{0}', space=vmem, size = 0x1000, scoped, tag = 'output window, operand 0, single buffered']
    #allocation3 [shape = 's32[1]{0}', space=sflag, size = 0x4, scoped, tag = 'scoped memory for lm_lstm_forward.1']
    %11 = vsyncpa [#allocation3], 0
    // Predicated region
    $region2: #{lm_lstm_forward.1} parent=1 // pred_check
      _
    $region3: #{lm_lstm_forward.1} parent=1 // pred_check_branch
      %13 = sbr.rel (0) target = $region5
    $region4: #{lm_lstm_forward.1} parent=1 // pred_region
      _
    $region5: #{lm_lstm_forward.1} parent=1 // pred_fallthru
      _
    // Predicated region
    $region6: #{lm_lstm_forward.1} parent=1 // pred_check
      _
    $region7: #{lm_lstm_forward.1} parent=1 // pred_check_branch
      %15 = sbr.rel (0) target = $region9
    $region8: #{lm_lstm_forward.1} parent=1 // pred_region
      _
    $region9: #{lm_lstm_forward.1} parent=1 // pred_fallthru
      _
    // Predicated region
    $region10: #{lm_lstm_forward.1} parent=1 // pred_check
      _
    $region11: #{lm_lstm_forward.1} parent=1 // pred_check_branch
      %17 = sbr.rel (0) target = $region13
    $region12: #{lm_lstm_forward.1} parent=1 // pred_region
      _
    $region13: #{lm_lstm_forward.1} parent=1 // pred_fallthru
      _
    // Predicated region
    $region14: #{lm_lstm_forward.1} parent=1 // pred_check
      _
    $region15: #{lm_lstm_forward.1} parent=1 // pred_check_branch
      %19 = sbr.rel (0) target = $region17
    $region16: #{lm_lstm_forward.1} parent=1 // pred_region
      _
    $region17: #{lm_lstm_forward.1} parent=1 // pred_fallthru
      _
    // Predicated region
    $region18: #{lm_lstm_forward.1} parent=1 // pred_check
      _
    $region19: #{lm_lstm_forward.1} parent=1 // pred_check_branch
      %21 = sbr.rel (0) target = $region21
    $region20: #{lm_lstm_forward.1} parent=1 // pred_region
      _
    $region21: #{lm_lstm_forward.1} parent=1 // pred_fallthru
      _
    // Predicated region
    $region22: #{lm_lstm_forward.1} parent=1 // pred_check
      _
    $region23: #{lm_lstm_forward.1} parent=1 // pred_check_branch
      %23 = sbr.rel (0) target = $region25
    $region24: #{lm_lstm_forward.1} parent=1 // pred_region
      _
    $region25: #{lm_lstm_forward.1} parent=1 // pred_fallthru
      _
    %v25 = vld [vmem:[%s0] sm:$0xf]
    %v26 = vld [vmem:[%s1] sm:$0xf]
    %v27 = vld [vmem:[%s1 + $0x4] sm:$0xf]
    %v28 = vld [vmem:[%s1 + $0x8] sm:$0xf]
    %v29 = vld [vmem:[%s1 + $0xc] sm:$0xf]
    %v30 = vld [vmem:[%s3] sm:$0x1]
    %v32 = vperm.slane %v30, 0
    %v38 = vunpack.c.l.b16 %v26
    %v39 = vunpack.c.l.b16 %v27
    %v40 = vunpack.c.l.b16 %v28
    %v41 = vunpack.c.l.b16 %v29
    %v42 = vpack.c.b16 %v39, %v38
    %v43 = vpack.c.b16 %v41, %v40
    %vm46 = vcmask 261120
    %v48 = vsel %vm46, %v25, 0
    %50 = vmatpush.bf16.msra.mxu0 0
    %51 = vmatpush.bf16.msra.mxu0 0
    %52 = vmatpush.bf16.msra.mxu0 0
    %53 = vmatpush.bf16.msra.mxu0 0
    %54 = vmatpush.bf16.msra.mxu0 0
    %55 = vmatpush.bf16.msra.mxu0 0
    %56 = vmatpush.bf16.msra.mxu0 %v43
    %57 = vmatpush.bf16.msra.mxu0 %v42
    %58 = vmatmul.bf16.gmra.mxu0 %v48
    %v59 = vpop.f32.mrf.mxu0
    %v60 = vadd.f32 %v32, %v59
    %v61 = vpop.f32.mrf.mxu0
    %62 = vdwg.mxu0
    %v63 = vld [vmem:[%s2] sm:$0xf]
    %v64 = vld [vmem:[%s2 + $0x4] sm:$0xf]
    %v65 = vld [vmem:[%s2 + $0x8] sm:$0xf]
    %v66 = vld [vmem:[%s2 + $0xc] sm:$0xf]
    %v67 = vlaneseq
    %v68 = vand.u32 %v67, 127
    %vm69 = vcmp.ge.s32.totalorder %v68, 64
    %vm70 = vcmp.lt.s32.totalorder %v68, 96
    %vm71 = vmand %vm69, %vm70
    %v76 = vunpack.c.l.b16 %v63
    %v77 = vunpack.c.l.b16 %v64
    %v78 = vunpack.c.l.b16 %v65
    %v79 = vunpack.c.l.b16 %v66
    %v80 = vpack.c.b16 %v77, %v76
    %v81 = vpack.c.b16 %v79, %v78
    %v85 = vsel %vm46, 0, 0
    %87 = vmatpush.bf16.msra.mxu0 0
    %88 = vmatpush.bf16.msra.mxu0 0
    %89 = vmatpush.bf16.msra.mxu0 0
    %90 = vmatpush.bf16.msra.mxu0 0
    %91 = vmatpush.bf16.msra.mxu0 0
    %92 = vmatpush.bf16.msra.mxu0 0
    %93 = vmatpush.bf16.msra.mxu0 %v81
    %94 = vmatpush.bf16.msra.mxu0 %v80
    %95 = vmatmul.bf16.gmra.mxu0 %v85
    %v96 = vpop.f32.mrf.mxu0
    %v97 = vadd.f32 0.0, %v96
    %v98 = vpop.f32.mrf.mxu0
    %99 = vdwg.mxu0
    %v100 = vadd.f32 %v60, %v97
    %v101 = vxor.u32 %v100, 2147483648
    %v102 = vmul.f32 %v101, 1.442695
    %v103 = vpow.pop %v102
    %v104 = vadd.f32 %v103, 1.0
    %v105 = vrcp.pop %v104
    %v106 = vmul.f32 %v104, %v105
    %v107 = vsub.f32 1.0, %v106
    %v108 = vmul.f32 %v105, %v107
    %v109 = vadd.f32 %v105, %v108
    %vm110 = vweird.f32 %v104
    %vm111 = vweird.f32 %v105
    %vm112 = vmor %vm110, %vm111
    %v113 = vsel %vm112, %v105, %v109
    %v114 = vand.u32 2147483647, %v104
    %vm115 = vcmp.eq.f32.partialorder %v114, 8.507059e+37
    %v116 = vand.u32 %v104, 2147483648
    %v117 = vor.u32 1.1754944e-38, %v116
    %v118 = vsel %vm115, %v117, %v113
    %v119 = vmul.f32 1.0, %v118
    %v120 = vtanh.pop %v100
    %v121 = vsel %vm71, %v120, %v119
    %v122 = vmul.f32 %v121, 0.0
    %124 = vrot.lane.b32.xlu0 %v121, 64
    %v125 = vpop.permute.xlu0 %124
    %v127 = vmul.f32 %v121, %v125
    %129 = vrot.lane.b32.xlu0 %v127, 32
    %v130 = vpop.permute.xlu0 %129
    %v132 = vadd.f32 %v122, %v130
    %v133 = vtanh.pop %v132
    %135 = vrot.lane.b32.xlu0 %v133, 64
    %v136 = vpop.permute.xlu0 %135
    %v138 = vmul.f32 %v121, %v136
    %v139 = vpack.c.bf16 %v138, %v138
    %141 = vrot.lane.b32.xlu0 %v139, 32
    %v142 = vpop.permute.xlu0 %141
    %v144 = vsel %vm46, %v142, 0
    %146 = vmatpush.bf16.msra.mxu0 0
    %147 = vmatpush.bf16.msra.mxu0 0
    %148 = vmatpush.bf16.msra.mxu0 0
    %149 = vmatpush.bf16.msra.mxu0 0
    %150 = vmatpush.bf16.msra.mxu0 0
    %151 = vmatpush.bf16.msra.mxu0 0
    %152 = vmatpush.bf16.msra.mxu0 %v81
    %153 = vmatpush.bf16.msra.mxu0 %v80
    %154 = vmatmul.bf16.gmra.mxu0 %v144
    %v155 = vpop.f32.mrf.mxu0
    %v156 = vadd.f32 0.0, %v155
    %v157 = vpop.f32.mrf.mxu0
    %158 = vdwg.mxu0
    %v160 = vrot.slane %v156, 7
    %v162 = vadd.f32 %v60, %v160
    %v163 = vxor.u32 %v162, 2147483648
    %v164 = vmul.f32 %v163, 1.442695
    %v165 = vpow.pop %v164
    %v166 = vadd.f32 %v165, 1.0
    %v167 = vrcp.pop %v166
    %v168 = vmul.f32 %v166, %v167
    %v169 = vsub.f32 1.0, %v168
    %v170 = vmul.f32 %v167, %v169
    %v171 = vadd.f32 %v167, %v170
    %vm172 = vweird.f32 %v166
    %vm173 = vweird.f32 %v167
    %vm174 = vmor %vm172, %vm173
    %v175 = vsel %vm174, %v167, %v171
    %v176 = vand.u32 2147483647, %v166
    %vm177 = vcmp.eq.f32.partialorder %v176, 8.507059e+37
    %v178 = vand.u32 %v166, 2147483648
    %v179 = vor.u32 1.1754944e-38, %v178
    %v180 = vsel %vm177, %v179, %v175
    %v181 = vmul.f32 1.0, %v180
    %v182 = vtanh.pop %v162
    %v183 = vsel %vm71, %v182, %v181
    %v185 = vrot.slane %v132, 7
    %v187 = vmul.f32 %v183, %v185
    %189 = vrot.lane.b32.xlu0 %v183, 64
    %v190 = vpop.permute.xlu0 %189
    %v192 = vmul.f32 %v183, %v190
    %194 = vrot.lane.b32.xlu0 %v192, 32
    %v195 = vpop.permute.xlu0 %194
    %v197 = vadd.f32 %v187, %v195
    %v198 = vtanh.pop %v197
    %200 = vrot.lane.b32.xlu0 %v198, 64
    %v201 = vpop.permute.xlu0 %200
    %v203 = vmul.f32 %v183, %v201
    %v204 = vpack.c.bf16 %v203, %v203
    %v206 = vshrl.u32 %v204, 16
    %208 = vrot.lane.b32.xlu0 %v206, 32
    %v209 = vpop.permute.xlu0 %208
    %v211 = vsel %vm46, %v209, 0
    %213 = vmatpush.bf16.msra.mxu0 0
    %214 = vmatpush.bf16.msra.mxu0 0
    %215 = vmatpush.bf16.msra.mxu0 0
    %216 = vmatpush.bf16.msra.mxu0 0
    %217 = vmatpush.bf16.msra.mxu0 0
    %218 = vmatpush.bf16.msra.mxu0 0
    %219 = vmatpush.bf16.msra.mxu0 %v81
    %220 = vmatpush.bf16.msra.mxu0 %v80
    %221 = vmatmul.bf16.gmra.mxu0 %v211
    %v222 = vpop.f32.mrf.mxu0
    %v223 = vadd.f32 0.0, %v222
    %v224 = vpop.f32.mrf.mxu0
    %225 = vdwg.mxu0
    %v227 = vrot.slane %v223, 6
    %v229 = vadd.f32 %v60, %v227
    %v230 = vxor.u32 %v229, 2147483648
    %v231 = vmul.f32 %v230, 1.442695
    %v232 = vpow.pop %v231
    %v233 = vadd.f32 %v232, 1.0
    %v234 = vrcp.pop %v233
    %v235 = vmul.f32 %v233, %v234
    %v236 = vsub.f32 1.0, %v235
    %v237 = vmul.f32 %v234, %v236
    %v238 = vadd.f32 %v234, %v237
    %vm239 = vweird.f32 %v233
    %vm240 = vweird.f32 %v234
    %vm241 = vmor %vm239, %vm240
    %v242 = vsel %vm241, %v234, %v238
    %v243 = vand.u32 2147483647, %v233
    %vm244 = vcmp.eq.f32.partialorder %v243, 8.507059e+37
    %v245 = vand.u32 %v233, 2147483648
    %v246 = vor.u32 1.1754944e-38, %v245
    %v247 = vsel %vm244, %v246, %v242
    %v248 = vmul.f32 1.0, %v247
    %v249 = vtanh.pop %v229
    %v250 = vsel %vm71, %v249, %v248
    %v252 = vrot.slane %v197, 7
    %v254 = vmul.f32 %v250, %v252
    %256 = vrot.lane.b32.xlu0 %v250, 64
    %v257 = vpop.permute.xlu0 %256
    %v259 = vmul.f32 %v250, %v257
    %261 = vrot.lane.b32.xlu0 %v259, 32
    %v262 = vpop.permute.xlu0 %261
    %v264 = vadd.f32 %v254, %v262
    %v265 = vtanh.pop %v264
    %267 = vrot.lane.b32.xlu0 %v265, 64
    %v268 = vpop.permute.xlu0 %267
    %v270 = vmul.f32 %v250, %v268
    %v271 = vpack.c.bf16 %v270, %v270
    %v273 = vrot.slane %v271, 1
    %274 = vrot.lane.b32.xlu0 %v273, 32
    %v275 = vpop.permute.xlu0 %274
    %v277 = vsel %vm46, %v275, 0
    %279 = vmatpush.bf16.msra.mxu0 0
    %280 = vmatpush.bf16.msra.mxu0 0
    %281 = vmatpush.bf16.msra.mxu0 0
    %282 = vmatpush.bf16.msra.mxu0 0
    %283 = vmatpush.bf16.msra.mxu0 0
    %284 = vmatpush.bf16.msra.mxu0 0
    %285 = vmatpush.bf16.msra.mxu0 %v81
    %286 = vmatpush.bf16.msra.mxu0 %v80
    %287 = vmatmul.bf16.gmra.mxu0 %v277
    %v288 = vpop.f32.mrf.mxu0
    %v289 = vadd.f32 0.0, %v288
    %v290 = vpop.f32.mrf.mxu0
    %291 = vdwg.mxu0
    %v293 = vrot.slane %v289, 5
    %v295 = vadd.f32 %v60, %v293
    %v296 = vxor.u32 %v295, 2147483648
    %v297 = vmul.f32 %v296, 1.442695
    %v298 = vpow.pop %v297
    %v299 = vadd.f32 %v298, 1.0
    %v300 = vrcp.pop %v299
    %v301 = vmul.f32 %v299, %v300
    %v302 = vsub.f32 1.0, %v301
    %v303 = vmul.f32 %v300, %v302
    %v304 = vadd.f32 %v300, %v303
    %vm305 = vweird.f32 %v299
    %vm306 = vweird.f32 %v300
    %vm307 = vmor %vm305, %vm306
    %v308 = vsel %vm307, %v300, %v304
    %v309 = vand.u32 2147483647, %v299
    %vm310 = vcmp.eq.f32.partialorder %v309, 8.507059e+37
    %v311 = vand.u32 %v299, 2147483648
    %v312 = vor.u32 1.1754944e-38, %v311
    %v313 = vsel %vm310, %v312, %v308
    %v314 = vmul.f32 1.0, %v313
    %v315 = vtanh.pop %v295
    %v316 = vsel %vm71, %v315, %v314
    %v318 = vrot.slane %v264, 7
    %v320 = vmul.f32 %v316, %v318
    %322 = vrot.lane.b32.xlu0 %v316, 64
    %v323 = vpop.permute.xlu0 %322
    %v325 = vmul.f32 %v316, %v323
    %327 = vrot.lane.b32.xlu0 %v325, 32
    %v328 = vpop.permute.xlu0 %327
    %v330 = vadd.f32 %v320, %v328
    %v331 = vtanh.pop %v330
    %333 = vrot.lane.b32.xlu0 %v331, 64
    %v334 = vpop.permute.xlu0 %333
    %v336 = vmul.f32 %v316, %v334
    %v337 = vpack.c.bf16 %v336, %v336
    %v339 = vshrl.u32 %v337, 16
    %v341 = vrot.slane %v339, 1
    %342 = vrot.lane.b32.xlu0 %v341, 32
    %v343 = vpop.permute.xlu0 %342
    %v345 = vsel %vm46, %v343, 0
    %347 = vmatpush.bf16.msra.mxu0 0
    %348 = vmatpush.bf16.msra.mxu0 0
    %349 = vmatpush.bf16.msra.mxu0 0
    %350 = vmatpush.bf16.msra.mxu0 0
    %351 = vmatpush.bf16.msra.mxu0 0
    %352 = vmatpush.bf16.msra.mxu0 0
    %353 = vmatpush.bf16.msra.mxu0 %v81
    %354 = vmatpush.bf16.msra.mxu0 %v80
    %355 = vmatmul.bf16.gmra.mxu0 %v345
    %v356 = vpop.f32.mrf.mxu0
    %v357 = vadd.f32 0.0, %v356
    %v358 = vpop.f32.mrf.mxu0
    %359 = vdwg.mxu0
    %v361 = vrot.slane %v357, 4
    %v363 = vadd.f32 %v60, %v361
    %v364 = vxor.u32 %v363, 2147483648
    %v365 = vmul.f32 %v364, 1.442695
    %v366 = vpow.pop %v365
    %v367 = vadd.f32 %v366, 1.0
    %v368 = vrcp.pop %v367
    %v369 = vmul.f32 %v367, %v368
    %v370 = vsub.f32 1.0, %v369
    %v371 = vmul.f32 %v368, %v370
    %v372 = vadd.f32 %v368, %v371
    %vm373 = vweird.f32 %v367
    %vm374 = vweird.f32 %v368
    %vm375 = vmor %vm373, %vm374
    %v376 = vsel %vm375, %v368, %v372
    %v377 = vand.u32 2147483647, %v367
    %vm378 = vcmp.eq.f32.partialorder %v377, 8.507059e+37
    %v379 = vand.u32 %v367, 2147483648
    %v380 = vor.u32 1.1754944e-38, %v379
    %v381 = vsel %vm378, %v380, %v376
    %v382 = vmul.f32 1.0, %v381
    %v383 = vtanh.pop %v363
    %v384 = vsel %vm71, %v383, %v382
    %v386 = vrot.slane %v330, 7
    %v388 = vmul.f32 %v384, %v386
    %390 = vrot.lane.b32.xlu0 %v384, 64
    %v391 = vpop.permute.xlu0 %390
    %v393 = vmul.f32 %v384, %v391
    %395 = vrot.lane.b32.xlu0 %v393, 32
    %v396 = vpop.permute.xlu0 %395
    %v398 = vadd.f32 %v388, %v396
    %v399 = vtanh.pop %v398
    %401 = vrot.lane.b32.xlu0 %v399, 64
    %v402 = vpop.permute.xlu0 %401
    %v404 = vmul.f32 %v384, %v402
    %v405 = vpack.c.bf16 %v404, %v404
    %v407 = vrot.slane %v405, 2
    %408 = vrot.lane.b32.xlu0 %v407, 32
    %v409 = vpop.permute.xlu0 %408
    %v411 = vsel %vm46, %v409, 0
    %413 = vmatpush.bf16.msra.mxu0 0
    %414 = vmatpush.bf16.msra.mxu0 0
    %415 = vmatpush.bf16.msra.mxu0 0
    %416 = vmatpush.bf16.msra.mxu0 0
    %417 = vmatpush.bf16.msra.mxu0 0
    %418 = vmatpush.bf16.msra.mxu0 0
    %419 = vmatpush.bf16.msra.mxu0 %v81
    %420 = vmatpush.bf16.msra.mxu0 %v80
    %421 = vmatmul.bf16.gmra.mxu0 %v411
    %v422 = vpop.f32.mrf.mxu0
    %v423 = vadd.f32 0.0, %v422
    %v424 = vpop.f32.mrf.mxu0
    %425 = vdwg.mxu0
    %v427 = vrot.slane %v423, 3
    %v429 = vadd.f32 %v60, %v427
    %v430 = vxor.u32 %v429, 2147483648
    %v431 = vmul.f32 %v430, 1.442695
    %v432 = vpow.pop %v431
    %v433 = vadd.f32 %v432, 1.0
    %v434 = vrcp.pop %v433
    %v435 = vmul.f32 %v433, %v434
    %v436 = vsub.f32 1.0, %v435
    %v437 = vmul.f32 %v434, %v436
    %v438 = vadd.f32 %v434, %v437
    %vm439 = vweird.f32 %v433
    %vm440 = vweird.f32 %v434
    %vm441 = vmor %vm439, %vm440
    %v442 = vsel %vm441, %v434, %v438
    %v443 = vand.u32 2147483647, %v433
    %vm444 = vcmp.eq.f32.partialorder %v443, 8.507059e+37
    %v445 = vand.u32 %v433, 2147483648
    %v446 = vor.u32 1.1754944e-38, %v445
    %v447 = vsel %vm444, %v446, %v442
    %v448 = vmul.f32 1.0, %v447
    %v449 = vtanh.pop %v429
    %v450 = vsel %vm71, %v449, %v448
    %v452 = vrot.slane %v398, 7
    %v454 = vmul.f32 %v450, %v452
    %456 = vrot.lane.b32.xlu0 %v450, 64
    %v457 = vpop.permute.xlu0 %456
    %v459 = vmul.f32 %v450, %v457
    %461 = vrot.lane.b32.xlu0 %v459, 32
    %v462 = vpop.permute.xlu0 %461
    %v464 = vadd.f32 %v454, %v462
    %v465 = vtanh.pop %v464
    %467 = vrot.lane.b32.xlu0 %v465, 64
    %v468 = vpop.permute.xlu0 %467
    %v470 = vmul.f32 %v450, %v468
    %v471 = vpack.c.bf16 %v470, %v470
    %v473 = vshrl.u32 %v471, 16
    %v475 = vrot.slane %v473, 2
    %476 = vrot.lane.b32.xlu0 %v475, 32
    %v477 = vpop.permute.xlu0 %476
    %v479 = vsel %vm46, %v477, 0
    %481 = vmatpush.bf16.msra.mxu0 0
    %482 = vmatpush.bf16.msra.mxu0 0
    %483 = vmatpush.bf16.msra.mxu0 0
    %484 = vmatpush.bf16.msra.mxu0 0
    %485 = vmatpush.bf16.msra.mxu0 0
    %486 = vmatpush.bf16.msra.mxu0 0
    %487 = vmatpush.bf16.msra.mxu0 %v81
    %488 = vmatpush.bf16.msra.mxu0 %v80
    %489 = vmatmul.bf16.gmra.mxu0 %v479
    %v490 = vpop.f32.mrf.mxu0
    %v491 = vadd.f32 0.0, %v490
    %v492 = vpop.f32.mrf.mxu0
    %493 = vdwg.mxu0
    %v495 = vrot.slane %v491, 2
    %v497 = vadd.f32 %v60, %v495
    %v498 = vxor.u32 %v497, 2147483648
    %v499 = vmul.f32 %v498, 1.442695
    %v500 = vpow.pop %v499
    %v501 = vadd.f32 %v500, 1.0
    %v502 = vrcp.pop %v501
    %v503 = vmul.f32 %v501, %v502
    %v504 = vsub.f32 1.0, %v503
    %v505 = vmul.f32 %v502, %v504
    %v506 = vadd.f32 %v502, %v505
    %vm507 = vweird.f32 %v501
    %vm508 = vweird.f32 %v502
    %vm509 = vmor %vm507, %vm508
    %v510 = vsel %vm509, %v502, %v506
    %v511 = vand.u32 2147483647, %v501
    %vm512 = vcmp.eq.f32.partialorder %v511, 8.507059e+37
    %v513 = vand.u32 %v501, 2147483648
    %v514 = vor.u32 1.1754944e-38, %v513
    %v515 = vsel %vm512, %v514, %v510
    %v516 = vmul.f32 1.0, %v515
    %v517 = vtanh.pop %v497
    %v518 = vsel %vm71, %v517, %v516
    %v520 = vrot.slane %v464, 7
    %v522 = vmul.f32 %v518, %v520
    %524 = vrot.lane.b32.xlu0 %v518, 64
    %v525 = vpop.permute.xlu0 %524
    %v527 = vmul.f32 %v518, %v525
    %529 = vrot.lane.b32.xlu0 %v527, 32
    %v530 = vpop.permute.xlu0 %529
    %v532 = vadd.f32 %v522, %v530
    %v533 = vtanh.pop %v532
    %535 = vrot.lane.b32.xlu0 %v533, 64
    %v536 = vpop.permute.xlu0 %535
    %v538 = vmul.f32 %v518, %v536
    %v539 = vpack.c.bf16 %v538, %v538
    %v541 = vrot.slane %v539, 3
    %542 = vrot.lane.b32.xlu0 %v541, 32
    %v543 = vpop.permute.xlu0 %542
    %v545 = vsel %vm46, %v543, 0
    %547 = vmatpush.bf16.msra.mxu0 0
    %548 = vmatpush.bf16.msra.mxu0 0
    %549 = vmatpush.bf16.msra.mxu0 0
    %550 = vmatpush.bf16.msra.mxu0 0
    %551 = vmatpush.bf16.msra.mxu0 0
    %552 = vmatpush.bf16.msra.mxu0 0
    %553 = vmatpush.bf16.msra.mxu0 %v81
    %554 = vmatpush.bf16.msra.mxu0 %v80
    %555 = vmatmul.bf16.gmra.mxu0 %v545
    %v556 = vpop.f32.mrf.mxu0
    %v557 = vadd.f32 0.0, %v556
    %v558 = vpop.f32.mrf.mxu0
    %559 = vdwg.mxu0
    %v561 = vrot.slane %v557, 1
    %v563 = vadd.f32 %v60, %v561
    %v564 = vxor.u32 %v563, 2147483648
    %v565 = vmul.f32 %v564, 1.442695
    %v566 = vpow.pop %v565
    %v567 = vadd.f32 %v566, 1.0
    %v568 = vrcp.pop %v567
    %v569 = vmul.f32 %v567, %v568
    %v570 = vsub.f32 1.0, %v569
    %v571 = vmul.f32 %v568, %v570
    %v572 = vadd.f32 %v568, %v571
    %vm573 = vweird.f32 %v567
    %vm574 = vweird.f32 %v568
    %vm575 = vmor %vm573, %vm574
    %v576 = vsel %vm575, %v568, %v572
    %v577 = vand.u32 2147483647, %v567
    %vm578 = vcmp.eq.f32.partialorder %v577, 8.507059e+37
    %v579 = vand.u32 %v567, 2147483648
    %v580 = vor.u32 1.1754944e-38, %v579
    %v581 = vsel %vm578, %v580, %v576
    %v582 = vmul.f32 1.0, %v581
    %v583 = vtanh.pop %v563
    %v584 = vsel %vm71, %v583, %v582
    %v586 = vrot.slane %v532, 7
    %v588 = vmul.f32 %v584, %v586
    %590 = vrot.lane.b32.xlu0 %v584, 64
    %v591 = vpop.permute.xlu0 %590
    %v593 = vmul.f32 %v584, %v591
    %595 = vrot.lane.b32.xlu0 %v593, 32
    %v596 = vpop.permute.xlu0 %595
    %v598 = vadd.f32 %v588, %v596
    %v599 = vtanh.pop %v598
    %601 = vrot.lane.b32.xlu0 %v599, 64
    %v602 = vpop.permute.xlu0 %601
    %v604 = vmul.f32 %v584, %v602
    %vm605 = vcmask 1040384
    %v606 = vsel %vm605, %v138, %v203
    %vm607 = vcmask 1041408
    %v608 = vsel %vm607, %v606, %v270
    %vm609 = vcmask 1042432
    %v610 = vsel %vm609, %v608, %v336
    %vm611 = vcmask 1043456
    %v612 = vsel %vm611, %v610, %v404
    %vm613 = vcmask 1044480
    %v614 = vsel %vm613, %v612, %v470
    %vm615 = vcmask 1045504
    %v616 = vsel %vm615, %v614, %v538
    %vm617 = vcmask 1046528
    %v618 = vsel %vm617, %v616, %v604
    %v619 = vpack.c.bf16 %v618, %v618
    %v620 = vld [vmem:[%s4] sm:$0xf]
    %v621 = vld [vmem:[%s4 + $0x4] sm:$0xf]
    %v622 = vld [vmem:[%s4 + $0x8] sm:$0xf]
    %v623 = vld [vmem:[%s4 + $0xc] sm:$0xf]
    %v624 = vld [vmem:[%s5] sm:$0x1]
    %v626 = vperm.slane %v624, 0
    %629 = vrot.lane.b32.xlu0 %v619, 32
    %v630 = vpop.permute.xlu0 %629
    %v635 = vunpack.c.l.b16 %v620
    %v636 = vunpack.c.l.b16 %v621
    %v637 = vunpack.c.l.b16 %v622
    %v638 = vunpack.c.l.b16 %v623
    %v639 = vpack.c.b16 %v636, %v635
    %v640 = vpack.c.b16 %v638, %v637
    %v644 = vsel %vm46, %v630, 0
    %646 = vmatpush.bf16.msra.mxu0 0
    %647 = vmatpush.bf16.msra.mxu0 0
    %648 = vmatpush.bf16.msra.mxu0 0
    %649 = vmatpush.bf16.msra.mxu0 0
    %650 = vmatpush.bf16.msra.mxu0 0
    %651 = vmatpush.bf16.msra.mxu0 0
    %652 = vmatpush.bf16.msra.mxu0 %v640
    %653 = vmatpush.bf16.msra.mxu0 %v639
    %654 = vmatmul.bf16.gmra.mxu0 %v644
    %v655 = vpop.f32.mrf.mxu0
    %v656 = vadd.f32 %v626, %v655
    %v657 = vpop.f32.mrf.mxu0
    %658 = vdwg.mxu0
    %vm659 = vcmask 130048
    %v660 = vsel %vm659, %v656, -inf
    %661 = vmax.xlane.f32.xlu0 %v660
    %v662 = vpop.xlane.xlu0 %661
    %v663 = vsub.f32 %v656, %v662
    %v664 = vmul.f32 %v663, 1.442695
    %v665 = vpow.pop %v664
    %v666 = vsel %vm659, %v665, 0.0
    %667 = vadd.xlane.f32.xlu0 %v666
    %v668 = vpop.xlane.xlu0 %667
    %v669 = vlog2.pop %v668
    %v670 = vmul.f32 %v669, 0.6931472
    %v671 = vsub.f32 %v663, %v670
    %672 = vst.msk [vmem:[#allocation2] sm:$0xff] %vm659, %v671
    // Predicated region
    $region26: #{lm_lstm_forward.1} parent=1 // pred_check
      _
    $region27: #{lm_lstm_forward.1} parent=1 // pred_check_branch
      %674 = sbr.rel (0) target = $region29
    $region28: #{lm_lstm_forward.1} parent=1 // pred_region
      %676 = vsyncadd [#allocation3], 0
      %s678 = sshll.u32 [#allocation2], 4
      %s679 = int_to_ptr.vmem [resolvable:$true] %s678
      %s680 = sshll.u32 %s6, 4
      %s681 = int_to_ptr.hbm [resolvable:$true] %s680
      %683 = dma.vmem_to_hbm [thread:$0]  %s679, 128, %s681, [#allocation3]
    $region29: #{lm_lstm_forward.1} parent=1 // pred_fallthru
      _
    // Predicated region
    $region30: #{lm_lstm_forward.1} parent=1 // pred_check
      _
    $region31: #{lm_lstm_forward.1} parent=1 // pred_check_branch
      %685 = sbr.rel (0) target = $region33
    $region32: #{lm_lstm_forward.1} parent=1 // pred_region
      %687 = dma.done [#allocation3], 128
    $region33: #{lm_lstm_forward.1} parent=1 // pred_fallthru
      _
    %688 = vsyncpa [#allocation3], 1

</llo_original>
